<compile_context>
chip_gen: v7x
topology: tpu7x:2x2x1
jax: 0.10.0
libtpu: 0.0.40
codegen_flags: <defaults>
</compile_context>

<pallas_src>
import functools

import jax
import jax.numpy as jnp
from jax import lax
from jax.experimental import pallas as pl
from jax.experimental.pallas import tpu as pltpu


def _round_up(v: int, m: int) -> int:
    return ((v + m - 1) // m) * m


def _fused_rnn_kernel(x_ref, wxh_ref, whh_ref, bias_ref, out_ref,
                      h_scratch, p_scratch, *, hoist_whh: bool, unroll: int):
    """One grid step = one (batch_chunk, time_block).

    Prologue (off the serial chain): P = x_blk @ W_xh^T + (b_xh + b_hh).
    Serial loop: h_t = tanh(h_{t-1} @ W_hh^T + p_t), hidden carried in VMEM.
    """
    tb, nb, hp = x_ref.shape
    w_dtype = whh_ref.dtype

    # Reset the hidden state at the first time block of each batch chunk.
    # (Time is grid axis 1; keying off axis 0 would carry h across batch chunks.)
    @pl.when(pl.program_id(1) == 0)
    def _():
        h_scratch[...] = jnp.zeros_like(h_scratch)

    # Hoisted input projection: one large matmul instead of Tb small ones on the
    # serial critical path. Elementwise math stays f32 (v5e has no bf16 VPU/EUP).
    x_flat = x_ref[...].reshape(tb * nb, hp).astype(w_dtype)
    p = jnp.dot(x_flat, wxh_ref[...], preferred_element_type=jnp.float32)
    p_scratch[...] = (p + bias_ref[...]).reshape(tb, nb, hp)

    # Small weights: hold W_hh^T in vregs across the whole block. Large H_pad:
    # read it from VMEM inside the step to avoid vreg spills (only 64 vregs).
    whh_hoisted = whh_ref[...] if hoist_whh else None

    def step(i, h_prev):
        whh = whh_hoisted if hoist_whh else whh_ref[...]
        pre = jnp.dot(h_prev.astype(w_dtype), whh,
                      preferred_element_type=jnp.float32) + p_scratch[i]
        h_new = jnp.tanh(pre)                      # EUP, f32
        out_ref[i] = h_new.astype(out_ref.dtype)   # lane/sublane-dense slab store
        return h_new

    h_final = lax.fori_loop(0, tb, step, h_scratch[...], unroll=unroll)
    h_scratch[...] = h_final


def rnn_cell_forward(x, W_hh, b_hh, W_xh, b_xh, *,
                     time_block: int = 64, batch_block: int = 128,
                     use_bf16_matmul: bool = False):
    """x: (N, L, H) float32. Returns memories (N, L, H) matching PyTorch RNNCell."""
    N, L, H = x.shape

    # Lane/sublane-dense padded sizes.
    H_pad = _round_up(max(H, 128), 128)                    # lane width
    Nb = min(_round_up(N, 8), _round_up(batch_block, 8))   # batch rows per chunk
    N_pad = _round_up(N, Nb)

    w_dtype = jnp.bfloat16 if use_bf16_matmul else jnp.float32
    w_bytes = 2 if use_bf16_matmul else 4

    # Re-derive the time block against a conservative VMEM budget: the same
    # tiling must also fit v7x's 64 MiB physical / 32 MiB default scoped VMEM.
    def vmem_footprint(tb):
        blk = tb * Nb * H_pad * 4                          # one f32 (Tb,Nb,Hp) block
        return (2 * blk                                    # x: double-buffered
                + 2 * blk                                  # out: double-buffered
                + 2 * 2 * H_pad * H_pad * w_bytes          # W_xh^T, W_hh^T (2 bufs each)
                + blk                                      # P scratch
                + Nb * H_pad * 4                           # hidden carry
                + 2 * H_pad * 4)                           # bias

    budget = 20 * 1024 * 1024
    Tb = max(1, min(L, time_block))
    while Tb > 8 and vmem_footprint(Tb) > budget:
        Tb = max(8, Tb // 2)
    L_pad = _round_up(L, Tb)

    # Pre-transpose Linear weights ((out,in) -> (in,out)), zero-pad, fold biases.
    # Zero-padded hidden columns stay exactly 0 through tanh and never feed real
    # columns; padded batch rows / trailing timesteps are sliced off at the end.
    whh_t = jnp.zeros((H_pad, H_pad), w_dtype).at[:H, :H].set(W_hh.T.astype(w_dtype))
    wxh_t = jnp.zeros((H_pad, H_pad), w_dtype).at[:H, :H].set(W_xh.T.astype(w_dtype))
    bias = jnp.zeros((1, H_pad), jnp.float32).at[0, :H].set(
        (b_hh + b_xh).astype(jnp.float32))

    # Time-major, padded input (L_pad, N_pad, H_pad).
    # TODO(synk): for large N*L*H, fold this pad+transpose into the kernel's DMA
    # pattern (batch-major BlockSpec + in-kernel relayout) to skip one HBM pass.
    x_tm = jnp.zeros((L_pad, N_pad, H_pad), jnp.float32)
    x_tm = x_tm.at[:L, :N, :H].set(jnp.transpose(x, (1, 0, 2)).astype(jnp.float32))

    hoist_whh = (H_pad * H_pad * w_bytes) <= (128 * 1024)  # <= 32 vregs
    unroll = min(Tb, 8)

    kernel = functools.partial(_fused_rnn_kernel, hoist_whh=hoist_whh, unroll=unroll)

    out_tm = pl.pallas_call(
        kernel,
        out_shape=jax.ShapeDtypeStruct((L_pad, N_pad, H_pad), x.dtype),
        grid_spec=pltpu.PrefetchScalarGridSpec(
            num_scalar_prefetch=0,
            grid=(N_pad // Nb, L_pad // Tb),       # (parallel batch, serial time)
            in_specs=[
                pl.BlockSpec((Tb, Nb, H_pad), lambda b, t: (t, b, 0)),  # x block
                pl.BlockSpec((H_pad, H_pad), lambda b, t: (0, 0)),      # W_xh^T
                pl.BlockSpec((H_pad, H_pad), lambda b, t: (0, 0)),      # W_hh^T
                pl.BlockSpec((1, H_pad), lambda b, t: (0, 0)),          # folded bias
            ],
            out_specs=pl.BlockSpec((Tb, Nb, H_pad), lambda b, t: (t, b, 0)),
            scratch_shapes=[
                pltpu.VMEM((Nb, H_pad), jnp.float32),       # hidden carry
                pltpu.VMEM((Tb, Nb, H_pad), jnp.float32),   # projected inputs P
            ],
        ),
        compiler_params=pltpu.CompilerParams(
            # Batch chunks are independent -> "parallel" (split across the two
            # TensorCores on v7x); the time axis is the serial recurrence.
            dimension_semantics=("parallel", "arbitrary"),
            vmem_limit_bytes=int(max(32 * 1024 * 1024,
                                     vmem_footprint(Tb) + 8 * 1024 * 1024)),
        ),
    )(x_tm, wxh_t, whh_t, bias)

    # Slice padding away and return in the PyTorch (N, L, H) convention.
    return jnp.transpose(out_tm[:L, :N, :H], (1, 0, 2))


def rnn_cell_reference(x, W_hh, b_hh, W_xh, b_xh):
    """Pure-JAX reference matching the PyTorch forward loop."""
    N, L, H = x.shape
    h = jnp.zeros((N, H), dtype=jnp.float32)
    outs = []
    for t in range(L):
        h = jnp.tanh(h @ W_hh.T + b_hh + x[:, t] @ W_xh.T + b_xh)
        outs.append(h)
    return jnp.stack(outs, axis=1)


if __name__ == "__main__":
    H = 32
    key = jax.random.PRNGKey(0)
    kx, k1, k2, k3, k4, kx2 = jax.random.split(key, 6)

    # Deterministic parameter init (PyTorch Linear default: U(-1/sqrt(H), 1/sqrt(H))).
    bound = 1.0 / jnp.sqrt(jnp.float32(H))
    W_hh = jax.random.uniform(k1, (H, H), jnp.float32, -bound, bound)
    b_hh = jax.random.uniform(k2, (H,), jnp.float32, -bound, bound)
    W_xh = jax.random.uniform(k3, (H, H), jnp.float32, -bound, bound)
    b_xh = jax.random.uniform(k4, (H,), jnp.float32, -bound, bound)

    # --- Test 1: spec-sized input (N=2, L=8, H=32), single grid step ---------
    N, L = 2, 8
    x = jax.random.normal(kx, (N, L, H), dtype=jnp.float32)
    fwd = jax.jit(rnn_cell_forward)
    out = jax.block_until_ready(fwd(x, W_hh, b_hh, W_xh, b_xh))
    ref = rnn_cell_reference(x, W_hh, b_hh, W_xh, b_xh)
    assert out.shape == (N, L, H)
    assert jnp.allclose(out, ref, atol=1e-5, rtol=1e-5)

    # --- Test 2: multi time block + multi batch chunk (carry / reset paths) --
    N2, L2 = 10, 20
    x2 = jax.random.normal(kx2, (N2, L2, H), dtype=jnp.float32)
    fwd2 = jax.jit(functools.partial(rnn_cell_forward, time_block=8, batch_block=8))
    out2 = jax.block_until_ready(fwd2(x2, W_hh, b_hh, W_xh, b_xh))
    ref2 = rnn_cell_reference(x2, W_hh, b_hh, W_xh, b_xh)
    assert out2.shape == (N2, L2, H)
    assert jnp.allclose(out2, ref2, atol=1e-4, rtol=1e-4)

    print("KERNEL_OK")
</pallas_src>

<mosaic_0001>
module attributes {stable_mosaic.version = 11 : i64} {
  func.func @_fused_rnn_kernel(%arg0: i32, %arg1: i32, %arg2: memref<8x8x128xf32, #tpu.memory_space<vmem>>, %arg3: memref<128x128xf32, #tpu.memory_space<vmem>>, %arg4: memref<128x128xf32, #tpu.memory_space<vmem>>, %arg5: memref<1x128xf32, #tpu.memory_space<vmem>>, %arg6: memref<8x8x128xf32, #tpu.memory_space<vmem>>, %arg7: memref<8x128xf32, #tpu.memory_space<vmem>>, %arg8: memref<8x8x128xf32, #tpu.memory_space<vmem>>) attributes {dimension_semantics = [#tpu.dimension_semantics<parallel>, #tpu.dimension_semantics<arbitrary>], iteration_bounds = array<i64: 1, 1>, scalar_prefetch = 0 : i64, scratch_operands = 2 : i64, tpu.core_type = #tpu.core_type<tc>, window_params = [{transform_indices = @transform_0, window_bounds = array<i64: 8, 8, 128>}, {pipeline_mode = #tpu.pipeline_mode<synchronous>, transform_indices = @transform_1, window_bounds = array<i64: 128, 128>}, {pipeline_mode = #tpu.pipeline_mode<synchronous>, transform_indices = @transform_2, window_bounds = array<i64: 128, 128>}, {pipeline_mode = #tpu.pipeline_mode<synchronous>, transform_indices = @transform_3, window_bounds = array<i64: 1, 128>}, {transform_indices = @transform_4, window_bounds = array<i64: 8, 8, 128>}]} {
    %c0_i32 = arith.constant 0 : i32
    %0 = arith.cmpi eq, %arg1, %c0_i32 : i32
    %1 = arith.extui %0 : i1 to i32
    %c0_i32_0 = arith.constant 0 : i32
    %2 = arith.cmpi ne, %1, %c0_i32_0 : i32
    scf.if %2 {
      %cst_57 = arith.constant 0.000000e+00 : f32
      %95 = vector.broadcast %cst_57 : f32 to vector<8x128xf32>
      %c0_58 = arith.constant 0 : index
      %c0_59 = arith.constant 0 : index
      %96 = vector.load %arg7[%c0_58, %c0_59] : memref<8x128xf32, #tpu.memory_space<vmem>>, vector<8x128xf32>
      tpu.vector_store %arg7[%c0_58, %c0_59], %95 {strides = array<i32>} : memref<8x128xf32, #tpu.memory_space<vmem>>, vector<8x128xf32>,
    } else {
    }
    %c0 = arith.constant 0 : index
    %c0_1 = arith.constant 0 : index
    %c0_2 = arith.constant 0 : index
    %3 = vector.load %arg2[%c0, %c0_1, %c0_2] : memref<8x8x128xf32, #tpu.memory_space<vmem>>, vector<8x8x128xf32>
    %4 = vector.shape_cast %3 : vector<8x8x128xf32> to vector<64x128xf32>
    %c0_3 = arith.constant 0 : index
    %c0_4 = arith.constant 0 : index
    %5 = vector.load %arg3[%c0_3, %c0_4] : memref<128x128xf32, #tpu.memory_space<vmem>>, vector<128x128xf32>
    %cst = arith.constant dense<0.000000e+00> : vector<64x128xf32>
    %6 = tpu.matmul %4, %5, %cst {dimension_numbers = #tpu.dot_dimension_numbers<[1], [0], [0], [1], [0, 0, 1, 1], [], []>} : vector<64x128xf32>, vector<128x128xf32>, vector<64x128xf32> -> vector<64x128xf32>
    %c0_5 = arith.constant 0 : index
    %c0_6 = arith.constant 0 : index
    %7 = vector.load %arg5[%c0_5, %c0_6] : memref<1x128xf32, #tpu.memory_space<vmem>>, vector<1x128xf32>
    %8 = vector.broadcast %7 : vector<1x128xf32> to vector<64x128xf32>
    %9 = arith.addf %6, %8 : vector<64x128xf32>
    %10 = vector.shape_cast %9 : vector<64x128xf32> to vector<8x8x128xf32>
    %c0_7 = arith.constant 0 : index
    %c0_8 = arith.constant 0 : index
    %c0_9 = arith.constant 0 : index
    %11 = vector.load %arg8[%c0_7, %c0_8, %c0_9] : memref<8x8x128xf32, #tpu.memory_space<vmem>>, vector<8x8x128xf32>
    tpu.vector_store %arg8[%c0_7, %c0_8, %c0_9], %10 {strides = array<i32>} : memref<8x8x128xf32, #tpu.memory_space<vmem>>, vector<8x8x128xf32>,
    %c0_10 = arith.constant 0 : index
    %c0_11 = arith.constant 0 : index
    %12 = vector.load %arg4[%c0_10, %c0_11] : memref<128x128xf32, #tpu.memory_space<vmem>>, vector<128x128xf32>
    %c0_12 = arith.constant 0 : index
    %c0_13 = arith.constant 0 : index
    %13 = vector.load %arg7[%c0_12, %c0_13] : memref<8x128xf32, #tpu.memory_space<vmem>>, vector<8x128xf32>
    %c0_i32_14 = arith.constant 0 : i32
    %cst_15 = arith.constant dense<0.000000e+00> : vector<8x128xf32>
    %14 = tpu.matmul %13, %12, %cst_15 {dimension_numbers = #tpu.dot_dimension_numbers<[1], [0], [0], [1], [0, 0, 1, 1], [], []>} : vector<8x128xf32>, vector<128x128xf32>, vector<8x128xf32> -> vector<8x128xf32>
    %15 = arith.index_cast %c0_i32_14 : i32 to index
    %c0_16 = arith.constant 0 : index
    %c0_17 = arith.constant 0 : index
    %16 = vector.load %arg8[%15, %c0_16, %c0_17] : memref<8x8x128xf32, #tpu.memory_space<vmem>>, vector<1x8x128xf32>
    %17 = vector.shape_cast %16 : vector<1x8x128xf32> to vector<8x128xf32>
    %18 = arith.addf %14, %17 : vector<8x128xf32>
    %19 = math.tanh %18 : vector<8x128xf32>
    %20 = arith.index_cast %c0_i32_14 : i32 to index
    %c0_18 = arith.constant 0 : index
    %c0_19 = arith.constant 0 : index
    %21 = vector.load %arg6[%20, %c0_18, %c0_19] : memref<8x8x128xf32, #tpu.memory_space<vmem>>, vector<1x8x128xf32>
    %22 = vector.shape_cast %21 : vector<1x8x128xf32> to vector<8x128xf32>
    %23 = vector.shape_cast %19 : vector<8x128xf32> to vector<1x8x128xf32>
    tpu.vector_store %arg6[%20, %c0_18, %c0_19], %23 {strides = array<i32>} : memref<8x8x128xf32, #tpu.memory_space<vmem>>, vector<1x8x128xf32>,
    %c1_i32 = arith.constant 1 : i32
    %cst_20 = arith.constant dense<0.000000e+00> : vector<8x128xf32>
    %24 = tpu.matmul %19, %12, %cst_20 {dimension_numbers = #tpu.dot_dimension_numbers<[1], [0], [0], [1], [0, 0, 1, 1], [], []>} : vector<8x128xf32>, vector<128x128xf32>, vector<8x128xf32> -> vector<8x128xf32>
    %25 = arith.index_cast %c1_i32 : i32 to index
    %c0_21 = arith.constant 0 : index
    %c0_22 = arith.constant 0 : index
    %26 = vector.load %arg8[%25, %c0_21, %c0_22] : memref<8x8x128xf32, #tpu.memory_space<vmem>>, vector<1x8x128xf32>
    %27 = vector.shape_cast %26 : vector<1x8x128xf32> to vector<8x128xf32>
    %28 = arith.addf %24, %27 : vector<8x128xf32>
    %29 = math.tanh %28 : vector<8x128xf32>
    %30 = arith.index_cast %c1_i32 : i32 to index
    %c0_23 = arith.constant 0 : index
    %c0_24 = arith.constant 0 : index
    %31 = vector.load %arg6[%30, %c0_23, %c0_24] : memref<8x8x128xf32, #tpu.memory_space<vmem>>, vector<1x8x128xf32>
    %32 = vector.shape_cast %31 : vector<1x8x128xf32> to vector<8x128xf32>
    %33 = vector.shape_cast %29 : vector<8x128xf32> to vector<1x8x128xf32>
    tpu.vector_store %arg6[%30, %c0_23, %c0_24], %33 {strides = array<i32>} : memref<8x8x128xf32, #tpu.memory_space<vmem>>, vector<1x8x128xf32>,
    %c2_i32 = arith.constant 2 : i32
    %cst_25 = arith.constant dense<0.000000e+00> : vector<8x128xf32>
    %34 = tpu.matmul %29, %12, %cst_25 {dimension_numbers = #tpu.dot_dimension_numbers<[1], [0], [0], [1], [0, 0, 1, 1], [], []>} : vector<8x128xf32>, vector<128x128xf32>, vector<8x128xf32> -> vector<8x128xf32>
    %35 = arith.index_cast %c2_i32 : i32 to index
    %c0_26 = arith.constant 0 : index
    %c0_27 = arith.constant 0 : index
    %36 = vector.load %arg8[%35, %c0_26, %c0_27] : memref<8x8x128xf32, #tpu.memory_space<vmem>>, vector<1x8x128xf32>
    %37 = vector.shape_cast %36 : vector<1x8x128xf32> to vector<8x128xf32>
    %38 = arith.addf %34, %37 : vector<8x128xf32>
    %39 = math.tanh %38 : vector<8x128xf32>
    %40 = arith.index_cast %c2_i32 : i32 to index
    %c0_28 = arith.constant 0 : index
    %c0_29 = arith.constant 0 : index
    %41 = vector.load %arg6[%40, %c0_28, %c0_29] : memref<8x8x128xf32, #tpu.memory_space<vmem>>, vector<1x8x128xf32>
    %42 = vector.shape_cast %41 : vector<1x8x128xf32> to vector<8x128xf32>
    %43 = vector.shape_cast %39 : vector<8x128xf32> to vector<1x8x128xf32>
    tpu.vector_store %arg6[%40, %c0_28, %c0_29], %43 {strides = array<i32>} : memref<8x8x128xf32, #tpu.memory_space<vmem>>, vector<1x8x128xf32>,
    %c3_i32 = arith.constant 3 : i32
    %cst_30 = arith.constant dense<0.000000e+00> : vector<8x128xf32>
    %44 = tpu.matmul %39, %12, %cst_30 {dimension_numbers = #tpu.dot_dimension_numbers<[1], [0], [0], [1], [0, 0, 1, 1], [], []>} : vector<8x128xf32>, vector<128x128xf32>, vector<8x128xf32> -> vector<8x128xf32>
    %45 = arith.index_cast %c3_i32 : i32 to index
    %c0_31 = arith.constant 0 : index
    %c0_32 = arith.constant 0 : index
    %46 = vector.load %arg8[%45, %c0_31, %c0_32] : memref<8x8x128xf32, #tpu.memory_space<vmem>>, vector<1x8x128xf32>
    %47 = vector.shape_cast %46 : vector<1x8x128xf32> to vector<8x128xf32>
    %48 = arith.addf %44, %47 : vector<8x128xf32>
    %49 = math.tanh %48 : vector<8x128xf32>
    %50 = arith.index_cast %c3_i32 : i32 to index
    %c0_33 = arith.constant 0 : index
    %c0_34 = arith.constant 0 : index
    %51 = vector.load %arg6[%50, %c0_33, %c0_34] : memref<8x8x128xf32, #tpu.memory_space<vmem>>, vector<1x8x128xf32>
    %52 = vector.shape_cast %51 : vector<1x8x128xf32> to vector<8x128xf32>
    %53 = vector.shape_cast %49 : vector<8x128xf32> to vector<1x8x128xf32>
    tpu.vector_store %arg6[%50, %c0_33, %c0_34], %53 {strides = array<i32>} : memref<8x8x128xf32, #tpu.memory_space<vmem>>, vector<1x8x128xf32>,
    %c4_i32 = arith.constant 4 : i32
    %cst_35 = arith.constant dense<0.000000e+00> : vector<8x128xf32>
    %54 = tpu.matmul %49, %12, %cst_35 {dimension_numbers = #tpu.dot_dimension_numbers<[1], [0], [0], [1], [0, 0, 1, 1], [], []>} : vector<8x128xf32>, vector<128x128xf32>, vector<8x128xf32> -> vector<8x128xf32>
    %55 = arith.index_cast %c4_i32 : i32 to index
    %c0_36 = arith.constant 0 : index
    %c0_37 = arith.constant 0 : index
    %56 = vector.load %arg8[%55, %c0_36, %c0_37] : memref<8x8x128xf32, #tpu.memory_space<vmem>>, vector<1x8x128xf32>
    %57 = vector.shape_cast %56 : vector<1x8x128xf32> to vector<8x128xf32>
    %58 = arith.addf %54, %57 : vector<8x128xf32>
    %59 = math.tanh %58 : vector<8x128xf32>
    %60 = arith.index_cast %c4_i32 : i32 to index
    %c0_38 = arith.constant 0 : index
    %c0_39 = arith.constant 0 : index
    %61 = vector.load %arg6[%60, %c0_38, %c0_39] : memref<8x8x128xf32, #tpu.memory_space<vmem>>, vector<1x8x128xf32>
    %62 = vector.shape_cast %61 : vector<1x8x128xf32> to vector<8x128xf32>
    %63 = vector.shape_cast %59 : vector<8x128xf32> to vector<1x8x128xf32>
    tpu.vector_store %arg6[%60, %c0_38, %c0_39], %63 {strides = array<i32>} : memref<8x8x128xf32, #tpu.memory_space<vmem>>, vector<1x8x128xf32>,
    %c5_i32 = arith.constant 5 : i32
    %cst_40 = arith.constant dense<0.000000e+00> : vector<8x128xf32>
    %64 = tpu.matmul %59, %12, %cst_40 {dimension_numbers = #tpu.dot_dimension_numbers<[1], [0], [0], [1], [0, 0, 1, 1], [], []>} : vector<8x128xf32>, vector<128x128xf32>, vector<8x128xf32> -> vector<8x128xf32>
    %65 = arith.index_cast %c5_i32 : i32 to index
    %c0_41 = arith.constant 0 : index
    %c0_42 = arith.constant 0 : index
    %66 = vector.load %arg8[%65, %c0_41, %c0_42] : memref<8x8x128xf32, #tpu.memory_space<vmem>>, vector<1x8x128xf32>
    %67 = vector.shape_cast %66 : vector<1x8x128xf32> to vector<8x128xf32>
    %68 = arith.addf %64, %67 : vector<8x128xf32>
    %69 = math.tanh %68 : vector<8x128xf32>
    %70 = arith.index_cast %c5_i32 : i32 to index
    %c0_43 = arith.constant 0 : index
    %c0_44 = arith.constant 0 : index
    %71 = vector.load %arg6[%70, %c0_43, %c0_44] : memref<8x8x128xf32, #tpu.memory_space<vmem>>, vector<1x8x128xf32>
    %72 = vector.shape_cast %71 : vector<1x8x128xf32> to vector<8x128xf32>
    %73 = vector.shape_cast %69 : vector<8x128xf32> to vector<1x8x128xf32>
    tpu.vector_store %arg6[%70, %c0_43, %c0_44], %73 {strides = array<i32>} : memref<8x8x128xf32, #tpu.memory_space<vmem>>, vector<1x8x128xf32>,
    %c6_i32 = arith.constant 6 : i32
    %cst_45 = arith.constant dense<0.000000e+00> : vector<8x128xf32>
    %74 = tpu.matmul %69, %12, %cst_45 {dimension_numbers = #tpu.dot_dimension_numbers<[1], [0], [0], [1], [0, 0, 1, 1], [], []>} : vector<8x128xf32>, vector<128x128xf32>, vector<8x128xf32> -> vector<8x128xf32>
    %75 = arith.index_cast %c6_i32 : i32 to index
    %c0_46 = arith.constant 0 : index
    %c0_47 = arith.constant 0 : index
    %76 = vector.load %arg8[%75, %c0_46, %c0_47] : memref<8x8x128xf32, #tpu.memory_space<vmem>>, vector<1x8x128xf32>
    %77 = vector.shape_cast %76 : vector<1x8x128xf32> to vector<8x128xf32>
    %78 = arith.addf %74, %77 : vector<8x128xf32>
    %79 = math.tanh %78 : vector<8x128xf32>
    %80 = arith.index_cast %c6_i32 : i32 to index
    %c0_48 = arith.constant 0 : index
    %c0_49 = arith.constant 0 : index
    %81 = vector.load %arg6[%80, %c0_48, %c0_49] : memref<8x8x128xf32, #tpu.memory_space<vmem>>, vector<1x8x128xf32>
    %82 = vector.shape_cast %81 : vector<1x8x128xf32> to vector<8x128xf32>
    %83 = vector.shape_cast %79 : vector<8x128xf32> to vector<1x8x128xf32>
    tpu.vector_store %arg6[%80, %c0_48, %c0_49], %83 {strides = array<i32>} : memref<8x8x128xf32, #tpu.memory_space<vmem>>, vector<1x8x128xf32>,
    %c7_i32 = arith.constant 7 : i32
    %cst_50 = arith.constant dense<0.000000e+00> : vector<8x128xf32>
    %84 = tpu.matmul %79, %12, %cst_50 {dimension_numbers = #tpu.dot_dimension_numbers<[1], [0], [0], [1], [0, 0, 1, 1], [], []>} : vector<8x128xf32>, vector<128x128xf32>, vector<8x128xf32> -> vector<8x128xf32>
    %85 = arith.index_cast %c7_i32 : i32 to index
    %c0_51 = arith.constant 0 : index
    %c0_52 = arith.constant 0 : index
    %86 = vector.load %arg8[%85, %c0_51, %c0_52] : memref<8x8x128xf32, #tpu.memory_space<vmem>>, vector<1x8x128xf32>
    %87 = vector.shape_cast %86 : vector<1x8x128xf32> to vector<8x128xf32>
    %88 = arith.addf %84, %87 : vector<8x128xf32>
    %89 = math.tanh %88 : vector<8x128xf32>
    %90 = arith.index_cast %c7_i32 : i32 to index
    %c0_53 = arith.constant 0 : index
    %c0_54 = arith.constant 0 : index
    %91 = vector.load %arg6[%90, %c0_53, %c0_54] : memref<8x8x128xf32, #tpu.memory_space<vmem>>, vector<1x8x128xf32>
    %92 = vector.shape_cast %91 : vector<1x8x128xf32> to vector<8x128xf32>
    %93 = vector.shape_cast %89 : vector<8x128xf32> to vector<1x8x128xf32>
    tpu.vector_store %arg6[%90, %c0_53, %c0_54], %93 {strides = array<i32>} : memref<8x8x128xf32, #tpu.memory_space<vmem>>, vector<1x8x128xf32>,
    %c8_i32 = arith.constant 8 : i32
    %c0_55 = arith.constant 0 : index
    %c0_56 = arith.constant 0 : index
    %94 = vector.load %arg7[%c0_55, %c0_56] : memref<8x128xf32, #tpu.memory_space<vmem>>, vector<8x128xf32>
    tpu.vector_store %arg7[%c0_55, %c0_56], %89 {strides = array<i32>} : memref<8x128xf32, #tpu.memory_space<vmem>>, vector<8x128xf32>,
    return
  }
  func.func @transform_0(%arg0: i32, %arg1: i32) -> (i32, i32, i32) {
    %c0_i32 = arith.constant 0 : i32
    %c0_i32_0 = arith.constant 0 : i32
    return %arg1, %arg0, %c0_i32 : i32, i32, i32
  }
  func.func @transform_1(%arg0: i32, %arg1: i32) -> (i32, i32) {
    %c0_i32 = arith.constant 0 : i32
    %c0_i32_0 = arith.constant 0 : i32
    %c0_i32_1 = arith.constant 0 : i32
    return %c0_i32, %c0_i32_0 : i32, i32
  }
  func.func @transform_2(%arg0: i32, %arg1: i32) -> (i32, i32) {
    %c0_i32 = arith.constant 0 : i32
    %c0_i32_0 = arith.constant 0 : i32
    %c0_i32_1 = arith.constant 0 : i32
    return %c0_i32, %c0_i32_0 : i32, i32
  }
  func.func @transform_3(%arg0: i32, %arg1: i32) -> (i32, i32) {
    %c0_i32 = arith.constant 0 : i32
    %c0_i32_0 = arith.constant 0 : i32
    %c0_i32_1 = arith.constant 0 : i32
    return %c0_i32, %c0_i32_0 : i32, i32
  }
  func.func @transform_4(%arg0: i32, %arg1: i32) -> (i32, i32, i32) {
    %c0_i32 = arith.constant 0 : i32
    %c0_i32_0 = arith.constant 0 : i32
    return %arg1, %arg0, %c0_i32 : i32, i32, i32
  }
}

</mosaic_0001>

<llo_original>
// kernel: rnn_cell_forward.1
$region0: #{rnn_cell_forward.1}
  #allocation0 [shape = 'u32[]', space=smem, size = 0x4, offset = 0x4, fixed_abs, tag = 'smem constant byte address 0x4 - core index']
  #allocation1 [shape = 'u32[144,128]{1,0:T(1,128)}', space=vmem, size = 0x12000, scoped, tag = 'internal scratch']
  #allocation2 [shape = 'f32[8,128]{1,0:T(8,128)}', space=vmem, size = 0x1000, scoped, tag = 'scratch operand']
  #allocation3 [shape = 'f32[8,8,128]{2,1,0:T(8,128)}', space=vmem, size = 0x8000, scoped, tag = 'scratch operand']
  %s0 = inlined_call_operand.vmem [shape: f32[8,8,128], index: 0, kind: input, shape index: {}]
  %s1 = inlined_call_operand.vmem [shape: f32[128,128], index: 1, kind: input, shape index: {}]
  %s2 = inlined_call_operand.vmem [shape: f32[128,128], index: 2, kind: input, shape index: {}]
  %s3 = inlined_call_operand.vmem [shape: f32[1,128], index: 3, kind: input, shape index: {}]
  %s4 = inlined_call_operand.vmem [shape: f32[8,8,128], index: 4, kind: output, shape index: {}]
  %s5 = sld [smem:[#allocation0]]
  $region30: #{rnn_cell_forward.1} parent=0
    _
  %s7 = ssub.s32 1, %s5
  %s8 = scalar_select 0, %s7, %s5
  // Predicated region
  $region2: #{rnn_cell_forward.1} parent=0 // pred_check
    _
  $region3: #{rnn_cell_forward.1} parent=0 // pred_check_branch
    %10 = sbr.rel (0) target = $region5
  $region4: #{rnn_cell_forward.1} parent=0 // pred_region
    _
  $region5: #{rnn_cell_forward.1} parent=0 // pred_fallthru
    _
  // Predicated region
  $region6: #{rnn_cell_forward.1} parent=0 // pred_check
    _
  $region7: #{rnn_cell_forward.1} parent=0 // pred_check_branch
    %12 = sbr.rel (0) target = $region9
  $region8: #{rnn_cell_forward.1} parent=0 // pred_region
    _
  $region9: #{rnn_cell_forward.1} parent=0 // pred_fallthru
    _
  // Predicated region
  $region10: #{rnn_cell_forward.1} parent=0 // pred_check
    _
  $region11: #{rnn_cell_forward.1} parent=0 // pred_check_branch
    %14 = sbr.rel (0) target = $region13
  $region12: #{rnn_cell_forward.1} parent=0 // pred_region
    _
  $region13: #{rnn_cell_forward.1} parent=0 // pred_fallthru
    _
  // Predicated region
  $region14: #{rnn_cell_forward.1} parent=0 // pred_check
    _
  $region15: #{rnn_cell_forward.1} parent=0 // pred_check_branch
    %16 = sbr.rel (0) target = $region17
  $region16: #{rnn_cell_forward.1} parent=0 // pred_region
    _
  $region17: #{rnn_cell_forward.1} parent=0 // pred_fallthru
    _
  %p17 = scmp.eq.s32.totalorder 0, 0
  // Predicated region
  $region18: #{rnn_cell_forward.1} parent=0 // pred_check
    %p18 = pneg %p17
  $region19: #{rnn_cell_forward.1} parent=0 // pred_check_branch
    %20 = sbr.rel (%p18) target = $region21
  $region20: #{rnn_cell_forward.1} parent=0 // pred_region
    %21 = vst [vmem:[#allocation2] sm:$0xff] 0.0
  $region21: #{rnn_cell_forward.1} parent=0 // pred_fallthru
    _
  %v22 = vld [vmem:[%s0] sm:$0xff]
  %v23 = vld [vmem:[%s0 + $0x8] sm:$0xff]
  %v24 = vld [vmem:[%s0 + $0x10] sm:$0xff]
  %v25 = vld [vmem:[%s0 + $0x18] sm:$0xff]
  %v26 = vld [vmem:[%s0 + $0x20] sm:$0xff]
  %v27 = vld [vmem:[%s0 + $0x28] sm:$0xff]
  %v28 = vld [vmem:[%s0 + $0x30] sm:$0xff]
  %v29 = vld [vmem:[%s0 + $0x38] sm:$0xff]
  %v30 = vld [vmem:[%s1] sm:$0xff]
  %v31 = vld [vmem:[%s1 + $0x8] sm:$0xff]
  %v32 = vld [vmem:[%s1 + $0x10] sm:$0xff]
  %v33 = vld [vmem:[%s1 + $0x18] sm:$0xff]
  %v34 = vld [vmem:[%s1 + $0x20] sm:$0xff]
  %v35 = vld [vmem:[%s1 + $0x28] sm:$0xff]
  %v36 = vld [vmem:[%s1 + $0x30] sm:$0xff]
  %v37 = vld [vmem:[%s1 + $0x38] sm:$0xff]
  %v38 = vld [vmem:[%s1 + $0x40] sm:$0xff]
  %v39 = vld [vmem:[%s1 + $0x48] sm:$0xff]
  %v40 = vld [vmem:[%s1 + $0x50] sm:$0xff]
  %v41 = vld [vmem:[%s1 + $0x58] sm:$0xff]
  %v42 = vld [vmem:[%s1 + $0x60] sm:$0xff]
  %v43 = vld [vmem:[%s1 + $0x68] sm:$0xff]
  %v44 = vld [vmem:[%s1 + $0x70] sm:$0xff]
  %v45 = vld [vmem:[%s1 + $0x78] sm:$0xff]
  %v46 = vld [vmem:[%s3] sm:$0x1]
  %v48 = vlaneseq
  %v49 = vshrl.u32 %v48, 7
  %v50 = vsub.s32 0, %v49
  %v51 = vrot.slane %v46, %v50
  %53 = vmatprep.subr.mxu0 0.0
  %54 = vmatpush1.msra.mxu0 %v30
  %55 = vmatprep.subr.mxu0 0.0
  %56 = vmatpush1.msra.mxu0 %v31
  %57 = vmatprep.subr.mxu0 0.0
  %58 = vmatpush1.msra.mxu0 %v32
  %59 = vmatprep.subr.mxu0 0.0
  %60 = vmatpush1.msra.mxu0 %v33
  %61 = vmatprep.subr.mxu0 0.0
  %62 = vmatpush1.msra.mxu0 %v34
  %63 = vmatprep.subr.mxu0 0.0
  %64 = vmatpush1.msra.mxu0 %v35
  %65 = vmatprep.subr.mxu0 0.0
  %66 = vmatpush1.msra.mxu0 %v36
  %67 = vmatprep.subr.mxu0 0.0
  %68 = vmatpush1.msra.mxu0 %v37
  %69 = vmatprep.subr.mxu0 0.0
  %70 = vmatpush1.msra.mxu0 %v38
  %71 = vmatprep.subr.mxu0 0.0
  %72 = vmatpush1.msra.mxu0 %v39
  %73 = vmatprep.subr.mxu0 0.0
  %74 = vmatpush1.msra.mxu0 %v40
  %75 = vmatprep.subr.mxu0 0.0
  %76 = vmatpush1.msra.mxu0 %v41
  %77 = vmatprep.subr.mxu0 0.0
  %78 = vmatpush1.msra.mxu0 %v42
  %79 = vmatprep.subr.mxu0 0.0
  %80 = vmatpush1.msra.mxu0 %v43
  %81 = vmatprep.subr.mxu0 0.0
  %82 = vmatpush1.msra.mxu0 %v44
  %83 = vmatprep.subr.mxu0 0.0
  %84 = vmatpush1.msra.mxu0 %v45
  %85 = vmatprep.subr.mxu0 0.0
  %86 = vmatpush1.msra.mxu0 0.0
  %87 = vmatprep.subr.mxu0 0.0
  %88 = vmatpush1.msra.mxu0 0.0
  %89 = vmatprep.subr.mxu0 0.0
  %90 = vmatpush1.msra.mxu0 0.0
  %91 = vmatprep.subr.mxu0 0.0
  %92 = vmatpush1.msra.mxu0 0.0
  %93 = vmatprep.subr.mxu0 0.0
  %94 = vmatpush1.msra.mxu0 0.0
  %95 = vmatprep.subr.mxu0 0.0
  %96 = vmatpush1.msra.mxu0 0.0
  %97 = vmatprep.subr.mxu0 0.0
  %98 = vmatpush1.msra.mxu0 0.0
  %99 = vmatprep.subr.mxu0 0.0
  %100 = vmatpush1.msra.mxu0 0.0
  %101 = vmatprep.subr.mxu0 0.0
  %102 = vmatpush1.msra.mxu0 0.0
  %103 = vmatprep.subr.mxu0 0.0
  %104 = vmatpush1.msra.mxu0 0.0
  %105 = vmatprep.subr.mxu0 0.0
  %106 = vmatpush1.msra.mxu0 0.0
  %107 = vmatprep.subr.mxu0 0.0
  %108 = vmatpush1.msra.mxu0 0.0
  %109 = vmatprep.subr.mxu0 0.0
  %110 = vmatpush1.msra.mxu0 0.0
  %111 = vmatprep.subr.mxu0 0.0
  %112 = vmatpush1.msra.mxu0 0.0
  %113 = vmatprep.subr.mxu0 0.0
  %114 = vmatpush1.msra.mxu0 0.0
  %115 = vmatprep.subr.mxu0 0.0
  %116 = vmatpush1.msra.mxu0 0.0
  %117 = vmatprep.mubr.f32.mxu0 0.0
  %118 = vmatmul.mubr.f32.gmra.mrb[0].mxu0 %v22
  %v119 = vpop.f32.mrb[0].mxu0
  %v120 = vadd.f32 %v51, %v119
  %v121 = vpop.f32.mrb[0].mxu0
  %122 = vmatprep.mubr.f32.mxu0 0.0
  %123 = vmatmul.mubr.f32.gmra.mrb[0].mxu0 %v23
  %v124 = vpop.f32.mrb[0].mxu0
  %v125 = vadd.f32 %v51, %v124
  %v126 = vpop.f32.mrb[0].mxu0
  %127 = vmatprep.mubr.f32.mxu0 0.0
  %128 = vmatmul.mubr.f32.gmra.mrb[0].mxu0 %v24
  %v129 = vpop.f32.mrb[0].mxu0
  %v130 = vadd.f32 %v51, %v129
  %v131 = vpop.f32.mrb[0].mxu0
  %132 = vmatprep.mubr.f32.mxu0 0.0
  %133 = vmatmul.mubr.f32.gmra.mrb[0].mxu0 %v25
  %v134 = vpop.f32.mrb[0].mxu0
  %v135 = vadd.f32 %v51, %v134
  %v136 = vpop.f32.mrb[0].mxu0
  %137 = vmatprep.mubr.f32.mxu0 0.0
  %138 = vmatmul.mubr.f32.gmra.mrb[0].mxu0 %v26
  %v139 = vpop.f32.mrb[0].mxu0
  %v140 = vadd.f32 %v51, %v139
  %v141 = vpop.f32.mrb[0].mxu0
  %142 = vmatprep.mubr.f32.mxu0 0.0
  %143 = vmatmul.mubr.f32.gmra.mrb[0].mxu0 %v27
  %v144 = vpop.f32.mrb[0].mxu0
  %v145 = vadd.f32 %v51, %v144
  %v146 = vpop.f32.mrb[0].mxu0
  %147 = vmatprep.mubr.f32.mxu0 0.0
  %148 = vmatmul.mubr.f32.gmra.mrb[0].mxu0 %v28
  %v149 = vpop.f32.mrb[0].mxu0
  %v150 = vadd.f32 %v51, %v149
  %v151 = vpop.f32.mrb[0].mxu0
  %152 = vmatprep.mubr.f32.mxu0 0.0
  %153 = vmatmul.mubr.f32.gmra.mrb[0].mxu0 %v29
  %v154 = vpop.f32.mrb[0].mxu0
  %v155 = vadd.f32 %v51, %v154
  %v156 = vpop.f32.mrb[0].mxu0
  %157 = vdwg.mxu0
  %158 = vst [vmem:[#allocation3] sm:$0xff] %v120
  %159 = vst [vmem:[#allocation3 + $0x8] sm:$0xff] %v125
  %160 = vst [vmem:[#allocation3 + $0x10] sm:$0xff] %v130
  %161 = vst [vmem:[#allocation3 + $0x18] sm:$0xff] %v135
  %162 = vst [vmem:[#allocation3 + $0x20] sm:$0xff] %v140
  %163 = vst [vmem:[#allocation3 + $0x28] sm:$0xff] %v145
  %164 = vst [vmem:[#allocation3 + $0x30] sm:$0xff] %v150
  %165 = vst [vmem:[#allocation3 + $0x38] sm:$0xff] %v155
  %v166 = vld [vmem:[%s2] sm:$0xff]
  %v167 = vld [vmem:[%s2 + $0x8] sm:$0xff]
  %v168 = vld [vmem:[%s2 + $0x10] sm:$0xff]
  %v169 = vld [vmem:[%s2 + $0x18] sm:$0xff]
  %v170 = vld [vmem:[%s2 + $0x20] sm:$0xff]
  %v171 = vld [vmem:[%s2 + $0x28] sm:$0xff]
  %v172 = vld [vmem:[%s2 + $0x30] sm:$0xff]
  %v173 = vld [vmem:[%s2 + $0x38] sm:$0xff]
  %v174 = vld [vmem:[%s2 + $0x40] sm:$0xff]
  %v175 = vld [vmem:[%s2 + $0x48] sm:$0xff]
  %v176 = vld [vmem:[%s2 + $0x50] sm:$0xff]
  %v177 = vld [vmem:[%s2 + $0x58] sm:$0xff]
  %v178 = vld [vmem:[%s2 + $0x60] sm:$0xff]
  %v179 = vld [vmem:[%s2 + $0x68] sm:$0xff]
  %v180 = vld [vmem:[%s2 + $0x70] sm:$0xff]
  %v181 = vld [vmem:[%s2 + $0x78] sm:$0xff]
  %v182 = vld [vmem:[#allocation2] sm:$0xff]
  %v183 = vld [vmem:[#allocation3] sm:$0xff]
  %184 = vmatprep.subr.mxu0 0.0
  %185 = vmatpush1.msra.mxu0 %v166
  %186 = vmatprep.subr.mxu0 0.0
  %187 = vmatpush1.msra.mxu0 %v167
  %188 = vmatprep.subr.mxu0 0.0
  %189 = vmatpush1.msra.mxu0 %v168
  %190 = vmatprep.subr.mxu0 0.0
  %191 = vmatpush1.msra.mxu0 %v169
  %192 = vmatprep.subr.mxu0 0.0
  %193 = vmatpush1.msra.mxu0 %v170
  %194 = vmatprep.subr.mxu0 0.0
  %195 = vmatpush1.msra.mxu0 %v171
  %196 = vmatprep.subr.mxu0 0.0
  %197 = vmatpush1.msra.mxu0 %v172
  %198 = vmatprep.subr.mxu0 0.0
  %199 = vmatpush1.msra.mxu0 %v173
  %200 = vmatprep.subr.mxu0 0.0
  %201 = vmatpush1.msra.mxu0 %v174
  %202 = vmatprep.subr.mxu0 0.0
  %203 = vmatpush1.msra.mxu0 %v175
  %204 = vmatprep.subr.mxu0 0.0
  %205 = vmatpush1.msra.mxu0 %v176
  %206 = vmatprep.subr.mxu0 0.0
  %207 = vmatpush1.msra.mxu0 %v177
  %208 = vmatprep.subr.mxu0 0.0
  %209 = vmatpush1.msra.mxu0 %v178
  %210 = vmatprep.subr.mxu0 0.0
  %211 = vmatpush1.msra.mxu0 %v179
  %212 = vmatprep.subr.mxu0 0.0
  %213 = vmatpush1.msra.mxu0 %v180
  %214 = vmatprep.subr.mxu0 0.0
  %215 = vmatpush1.msra.mxu0 %v181
  %216 = vmatprep.subr.mxu0 0.0
  %217 = vmatpush1.msra.mxu0 0.0
  %218 = vmatprep.subr.mxu0 0.0
  %219 = vmatpush1.msra.mxu0 0.0
  %220 = vmatprep.subr.mxu0 0.0
  %221 = vmatpush1.msra.mxu0 0.0
  %222 = vmatprep.subr.mxu0 0.0
  %223 = vmatpush1.msra.mxu0 0.0
  %224 = vmatprep.subr.mxu0 0.0
  %225 = vmatpush1.msra.mxu0 0.0
  %226 = vmatprep.subr.mxu0 0.0
  %227 = vmatpush1.msra.mxu0 0.0
  %228 = vmatprep.subr.mxu0 0.0
  %229 = vmatpush1.msra.mxu0 0.0
  %230 = vmatprep.subr.mxu0 0.0
  %231 = vmatpush1.msra.mxu0 0.0
  %232 = vmatprep.subr.mxu0 0.0
  %233 = vmatpush1.msra.mxu0 0.0
  %234 = vmatprep.subr.mxu0 0.0
  %235 = vmatpush1.msra.mxu0 0.0
  %236 = vmatprep.subr.mxu0 0.0
  %237 = vmatpush1.msra.mxu0 0.0
  %238 = vmatprep.subr.mxu0 0.0
  %239 = vmatpush1.msra.mxu0 0.0
  %240 = vmatprep.subr.mxu0 0.0
  %241 = vmatpush1.msra.mxu0 0.0
  %242 = vmatprep.subr.mxu0 0.0
  %243 = vmatpush1.msra.mxu0 0.0
  %244 = vmatprep.subr.mxu0 0.0
  %245 = vmatpush1.msra.mxu0 0.0
  %246 = vmatprep.subr.mxu0 0.0
  %247 = vmatpush1.msra.mxu0 0.0
  %248 = vmatprep.mubr.f32.mxu0 0.0
  %249 = vmatmul.mubr.f32.gmra.mrb[0].mxu0 %v182
  %v250 = vpop.f32.mrb[0].mxu0
  %v251 = vadd.f32 %v183, %v250
  %v252 = vpop.f32.mrb[0].mxu0
  %253 = vdwg.mxu0
  %v254 = vtanh.pop %v251
  %255 = vst [vmem:[%s4] sm:$0xff] %v254
  %s256 = scalar_lea.vmem [#allocation3], 8
  %v257 = vld [vmem:[%s256] sm:$0xff]
  %258 = vmatprep.subr.mxu0 0.0
  %259 = vmatpush1.msra.mxu0 %v166
  %260 = vmatprep.subr.mxu0 0.0
  %261 = vmatpush1.msra.mxu0 %v167
  %262 = vmatprep.subr.mxu0 0.0
  %263 = vmatpush1.msra.mxu0 %v168
  %264 = vmatprep.subr.mxu0 0.0
  %265 = vmatpush1.msra.mxu0 %v169
  %266 = vmatprep.subr.mxu0 0.0
  %267 = vmatpush1.msra.mxu0 %v170
  %268 = vmatprep.subr.mxu0 0.0
  %269 = vmatpush1.msra.mxu0 %v171
  %270 = vmatprep.subr.mxu0 0.0
  %271 = vmatpush1.msra.mxu0 %v172
  %272 = vmatprep.subr.mxu0 0.0
  %273 = vmatpush1.msra.mxu0 %v173
  %274 = vmatprep.subr.mxu0 0.0
  %275 = vmatpush1.msra.mxu0 %v174
  %276 = vmatprep.subr.mxu0 0.0
  %277 = vmatpush1.msra.mxu0 %v175
  %278 = vmatprep.subr.mxu0 0.0
  %279 = vmatpush1.msra.mxu0 %v176
  %280 = vmatprep.subr.mxu0 0.0
  %281 = vmatpush1.msra.mxu0 %v177
  %282 = vmatprep.subr.mxu0 0.0
  %283 = vmatpush1.msra.mxu0 %v178
  %284 = vmatprep.subr.mxu0 0.0
  %285 = vmatpush1.msra.mxu0 %v179
  %286 = vmatprep.subr.mxu0 0.0
  %287 = vmatpush1.msra.mxu0 %v180
  %288 = vmatprep.subr.mxu0 0.0
  %289 = vmatpush1.msra.mxu0 %v181
  %290 = vmatprep.subr.mxu0 0.0
  %291 = vmatpush1.msra.mxu0 0.0
  %292 = vmatprep.subr.mxu0 0.0
  %293 = vmatpush1.msra.mxu0 0.0
  %294 = vmatprep.subr.mxu0 0.0
  %295 = vmatpush1.msra.mxu0 0.0
  %296 = vmatprep.subr.mxu0 0.0
  %297 = vmatpush1.msra.mxu0 0.0
  %298 = vmatprep.subr.mxu0 0.0
  %299 = vmatpush1.msra.mxu0 0.0
  %300 = vmatprep.subr.mxu0 0.0
  %301 = vmatpush1.msra.mxu0 0.0
  %302 = vmatprep.subr.mxu0 0.0
  %303 = vmatpush1.msra.mxu0 0.0
  %304 = vmatprep.subr.mxu0 0.0
  %305 = vmatpush1.msra.mxu0 0.0
  %306 = vmatprep.subr.mxu0 0.0
  %307 = vmatpush1.msra.mxu0 0.0
  %308 = vmatprep.subr.mxu0 0.0
  %309 = vmatpush1.msra.mxu0 0.0
  %310 = vmatprep.subr.mxu0 0.0
  %311 = vmatpush1.msra.mxu0 0.0
  %312 = vmatprep.subr.mxu0 0.0
  %313 = vmatpush1.msra.mxu0 0.0
  %314 = vmatprep.subr.mxu0 0.0
  %315 = vmatpush1.msra.mxu0 0.0
  %316 = vmatprep.subr.mxu0 0.0
  %317 = vmatpush1.msra.mxu0 0.0
  %318 = vmatprep.subr.mxu0 0.0
  %319 = vmatpush1.msra.mxu0 0.0
  %320 = vmatprep.subr.mxu0 0.0
  %321 = vmatpush1.msra.mxu0 0.0
  %322 = vmatprep.mubr.f32.mxu0 0.0
  %323 = vmatmul.mubr.f32.gmra.mrb[0].mxu0 %v254
  %v324 = vpop.f32.mrb[0].mxu0
  %v325 = vadd.f32 %v257, %v324
  %v326 = vpop.f32.mrb[0].mxu0
  %327 = vdwg.mxu0
  %v328 = vtanh.pop %v325
  %s329 = scalar_lea.vmem %s4, 8
  %330 = vst [vmem:[%s329] sm:$0xff] %v328
  %s331 = scalar_lea.vmem [#allocation3], 16
  %v332 = vld [vmem:[%s331] sm:$0xff]
  %333 = vmatprep.subr.mxu0 0.0
  %334 = vmatpush1.msra.mxu0 %v166
  %335 = vmatprep.subr.mxu0 0.0
  %336 = vmatpush1.msra.mxu0 %v167
  %337 = vmatprep.subr.mxu0 0.0
  %338 = vmatpush1.msra.mxu0 %v168
  %339 = vmatprep.subr.mxu0 0.0
  %340 = vmatpush1.msra.mxu0 %v169
  %341 = vmatprep.subr.mxu0 0.0
  %342 = vmatpush1.msra.mxu0 %v170
  %343 = vmatprep.subr.mxu0 0.0
  %344 = vmatpush1.msra.mxu0 %v171
  %345 = vmatprep.subr.mxu0 0.0
  %346 = vmatpush1.msra.mxu0 %v172
  %347 = vmatprep.subr.mxu0 0.0
  %348 = vmatpush1.msra.mxu0 %v173
  %349 = vmatprep.subr.mxu0 0.0
  %350 = vmatpush1.msra.mxu0 %v174
  %351 = vmatprep.subr.mxu0 0.0
  %352 = vmatpush1.msra.mxu0 %v175
  %353 = vmatprep.subr.mxu0 0.0
  %354 = vmatpush1.msra.mxu0 %v176
  %355 = vmatprep.subr.mxu0 0.0
  %356 = vmatpush1.msra.mxu0 %v177
  %357 = vmatprep.subr.mxu0 0.0
  %358 = vmatpush1.msra.mxu0 %v178
  %359 = vmatprep.subr.mxu0 0.0
  %360 = vmatpush1.msra.mxu0 %v179
  %361 = vmatprep.subr.mxu0 0.0
  %362 = vmatpush1.msra.mxu0 %v180
  %363 = vmatprep.subr.mxu0 0.0
  %364 = vmatpush1.msra.mxu0 %v181
  %365 = vmatprep.subr.mxu0 0.0
  %366 = vmatpush1.msra.mxu0 0.0
  %367 = vmatprep.subr.mxu0 0.0
  %368 = vmatpush1.msra.mxu0 0.0
  %369 = vmatprep.subr.mxu0 0.0
  %370 = vmatpush1.msra.mxu0 0.0
  %371 = vmatprep.subr.mxu0 0.0
  %372 = vmatpush1.msra.mxu0 0.0
  %373 = vmatprep.subr.mxu0 0.0
  %374 = vmatpush1.msra.mxu0 0.0
  %375 = vmatprep.subr.mxu0 0.0
  %376 = vmatpush1.msra.mxu0 0.0
  %377 = vmatprep.subr.mxu0 0.0
  %378 = vmatpush1.msra.mxu0 0.0
  %379 = vmatprep.subr.mxu0 0.0
  %380 = vmatpush1.msra.mxu0 0.0
  %381 = vmatprep.subr.mxu0 0.0
  %382 = vmatpush1.msra.mxu0 0.0
  %383 = vmatprep.subr.mxu0 0.0
  %384 = vmatpush1.msra.mxu0 0.0
  %385 = vmatprep.subr.mxu0 0.0
  %386 = vmatpush1.msra.mxu0 0.0
  %387 = vmatprep.subr.mxu0 0.0
  %388 = vmatpush1.msra.mxu0 0.0
  %389 = vmatprep.subr.mxu0 0.0
  %390 = vmatpush1.msra.mxu0 0.0
  %391 = vmatprep.subr.mxu0 0.0
  %392 = vmatpush1.msra.mxu0 0.0
  %393 = vmatprep.subr.mxu0 0.0
  %394 = vmatpush1.msra.mxu0 0.0
  %395 = vmatprep.subr.mxu0 0.0
  %396 = vmatpush1.msra.mxu0 0.0
  %397 = vmatprep.mubr.f32.mxu0 0.0
  %398 = vmatmul.mubr.f32.gmra.mrb[0].mxu0 %v328
  %v399 = vpop.f32.mrb[0].mxu0
  %v400 = vadd.f32 %v332, %v399
  %v401 = vpop.f32.mrb[0].mxu0
  %402 = vdwg.mxu0
  %v403 = vtanh.pop %v400
  %s404 = scalar_lea.vmem %s4, 16
  %405 = vst [vmem:[%s404] sm:$0xff] %v403
  %s406 = scalar_lea.vmem [#allocation3], 24
  %v407 = vld [vmem:[%s406] sm:$0xff]
  %408 = vmatprep.subr.mxu0 0.0
  %409 = vmatpush1.msra.mxu0 %v166
  %410 = vmatprep.subr.mxu0 0.0
  %411 = vmatpush1.msra.mxu0 %v167
  %412 = vmatprep.subr.mxu0 0.0
  %413 = vmatpush1.msra.mxu0 %v168
  %414 = vmatprep.subr.mxu0 0.0
  %415 = vmatpush1.msra.mxu0 %v169
  %416 = vmatprep.subr.mxu0 0.0
  %417 = vmatpush1.msra.mxu0 %v170
  %418 = vmatprep.subr.mxu0 0.0
  %419 = vmatpush1.msra.mxu0 %v171
  %420 = vmatprep.subr.mxu0 0.0
  %421 = vmatpush1.msra.mxu0 %v172
  %422 = vmatprep.subr.mxu0 0.0
  %423 = vmatpush1.msra.mxu0 %v173
  %424 = vmatprep.subr.mxu0 0.0
  %425 = vmatpush1.msra.mxu0 %v174
  %426 = vmatprep.subr.mxu0 0.0
  %427 = vmatpush1.msra.mxu0 %v175
  %428 = vmatprep.subr.mxu0 0.0
  %429 = vmatpush1.msra.mxu0 %v176
  %430 = vmatprep.subr.mxu0 0.0
  %431 = vmatpush1.msra.mxu0 %v177
  %432 = vmatprep.subr.mxu0 0.0
  %433 = vmatpush1.msra.mxu0 %v178
  %434 = vmatprep.subr.mxu0 0.0
  %435 = vmatpush1.msra.mxu0 %v179
  %436 = vmatprep.subr.mxu0 0.0
  %437 = vmatpush1.msra.mxu0 %v180
  %438 = vmatprep.subr.mxu0 0.0
  %439 = vmatpush1.msra.mxu0 %v181
  %440 = vmatprep.subr.mxu0 0.0
  %441 = vmatpush1.msra.mxu0 0.0
  %442 = vmatprep.subr.mxu0 0.0
  %443 = vmatpush1.msra.mxu0 0.0
  %444 = vmatprep.subr.mxu0 0.0
  %445 = vmatpush1.msra.mxu0 0.0
  %446 = vmatprep.subr.mxu0 0.0
  %447 = vmatpush1.msra.mxu0 0.0
  %448 = vmatprep.subr.mxu0 0.0
  %449 = vmatpush1.msra.mxu0 0.0
  %450 = vmatprep.subr.mxu0 0.0
  %451 = vmatpush1.msra.mxu0 0.0
  %452 = vmatprep.subr.mxu0 0.0
  %453 = vmatpush1.msra.mxu0 0.0
  %454 = vmatprep.subr.mxu0 0.0
  %455 = vmatpush1.msra.mxu0 0.0
  %456 = vmatprep.subr.mxu0 0.0
  %457 = vmatpush1.msra.mxu0 0.0
  %458 = vmatprep.subr.mxu0 0.0
  %459 = vmatpush1.msra.mxu0 0.0
  %460 = vmatprep.subr.mxu0 0.0
  %461 = vmatpush1.msra.mxu0 0.0
  %462 = vmatprep.subr.mxu0 0.0
  %463 = vmatpush1.msra.mxu0 0.0
  %464 = vmatprep.subr.mxu0 0.0
  %465 = vmatpush1.msra.mxu0 0.0
  %466 = vmatprep.subr.mxu0 0.0
  %467 = vmatpush1.msra.mxu0 0.0
  %468 = vmatprep.subr.mxu0 0.0
  %469 = vmatpush1.msra.mxu0 0.0
  %470 = vmatprep.subr.mxu0 0.0
  %471 = vmatpush1.msra.mxu0 0.0
  %472 = vmatprep.mubr.f32.mxu0 0.0
  %473 = vmatmul.mubr.f32.gmra.mrb[0].mxu0 %v403
  %v474 = vpop.f32.mrb[0].mxu0
  %v475 = vadd.f32 %v407, %v474
  %v476 = vpop.f32.mrb[0].mxu0
  %477 = vdwg.mxu0
  %v478 = vtanh.pop %v475
  %s479 = scalar_lea.vmem %s4, 24
  %480 = vst [vmem:[%s479] sm:$0xff] %v478
  %s481 = scalar_lea.vmem [#allocation3], 32
  %v482 = vld [vmem:[%s481] sm:$0xff]
  %483 = vmatprep.subr.mxu0 0.0
  %484 = vmatpush1.msra.mxu0 %v166
  %485 = vmatprep.subr.mxu0 0.0
  %486 = vmatpush1.msra.mxu0 %v167
  %487 = vmatprep.subr.mxu0 0.0
  %488 = vmatpush1.msra.mxu0 %v168
  %489 = vmatprep.subr.mxu0 0.0
  %490 = vmatpush1.msra.mxu0 %v169
  %491 = vmatprep.subr.mxu0 0.0
  %492 = vmatpush1.msra.mxu0 %v170
  %493 = vmatprep.subr.mxu0 0.0
  %494 = vmatpush1.msra.mxu0 %v171
  %495 = vmatprep.subr.mxu0 0.0
  %496 = vmatpush1.msra.mxu0 %v172
  %497 = vmatprep.subr.mxu0 0.0
  %498 = vmatpush1.msra.mxu0 %v173
  %499 = vmatprep.subr.mxu0 0.0
  %500 = vmatpush1.msra.mxu0 %v174
  %501 = vmatprep.subr.mxu0 0.0
  %502 = vmatpush1.msra.mxu0 %v175
  %503 = vmatprep.subr.mxu0 0.0
  %504 = vmatpush1.msra.mxu0 %v176
  %505 = vmatprep.subr.mxu0 0.0
  %506 = vmatpush1.msra.mxu0 %v177
  %507 = vmatprep.subr.mxu0 0.0
  %508 = vmatpush1.msra.mxu0 %v178
  %509 = vmatprep.subr.mxu0 0.0
  %510 = vmatpush1.msra.mxu0 %v179
  %511 = vmatprep.subr.mxu0 0.0
  %512 = vmatpush1.msra.mxu0 %v180
  %513 = vmatprep.subr.mxu0 0.0
  %514 = vmatpush1.msra.mxu0 %v181
  %515 = vmatprep.subr.mxu0 0.0
  %516 = vmatpush1.msra.mxu0 0.0
  %517 = vmatprep.subr.mxu0 0.0
  %518 = vmatpush1.msra.mxu0 0.0
  %519 = vmatprep.subr.mxu0 0.0
  %520 = vmatpush1.msra.mxu0 0.0
  %521 = vmatprep.subr.mxu0 0.0
  %522 = vmatpush1.msra.mxu0 0.0
  %523 = vmatprep.subr.mxu0 0.0
  %524 = vmatpush1.msra.mxu0 0.0
  %525 = vmatprep.subr.mxu0 0.0
  %526 = vmatpush1.msra.mxu0 0.0
  %527 = vmatprep.subr.mxu0 0.0
  %528 = vmatpush1.msra.mxu0 0.0
  %529 = vmatprep.subr.mxu0 0.0
  %530 = vmatpush1.msra.mxu0 0.0
  %531 = vmatprep.subr.mxu0 0.0
  %532 = vmatpush1.msra.mxu0 0.0
  %533 = vmatprep.subr.mxu0 0.0
  %534 = vmatpush1.msra.mxu0 0.0
  %535 = vmatprep.subr.mxu0 0.0
  %536 = vmatpush1.msra.mxu0 0.0
  %537 = vmatprep.subr.mxu0 0.0
  %538 = vmatpush1.msra.mxu0 0.0
  %539 = vmatprep.subr.mxu0 0.0
  %540 = vmatpush1.msra.mxu0 0.0
  %541 = vmatprep.subr.mxu0 0.0
  %542 = vmatpush1.msra.mxu0 0.0
  %543 = vmatprep.subr.mxu0 0.0
  %544 = vmatpush1.msra.mxu0 0.0
  %545 = vmatprep.subr.mxu0 0.0
  %546 = vmatpush1.msra.mxu0 0.0
  %547 = vmatprep.mubr.f32.mxu0 0.0
  %548 = vmatmul.mubr.f32.gmra.mrb[0].mxu0 %v478
  %v549 = vpop.f32.mrb[0].mxu0
  %v550 = vadd.f32 %v482, %v549
  %v551 = vpop.f32.mrb[0].mxu0
  %552 = vdwg.mxu0
  %v553 = vtanh.pop %v550
  %s554 = scalar_lea.vmem %s4, 32
  %555 = vst [vmem:[%s554] sm:$0xff] %v553
  %s556 = scalar_lea.vmem [#allocation3], 40
  %v557 = vld [vmem:[%s556] sm:$0xff]
  %558 = vmatprep.subr.mxu0 0.0
  %559 = vmatpush1.msra.mxu0 %v166
  %560 = vmatprep.subr.mxu0 0.0
  %561 = vmatpush1.msra.mxu0 %v167
  %562 = vmatprep.subr.mxu0 0.0
  %563 = vmatpush1.msra.mxu0 %v168
  %564 = vmatprep.subr.mxu0 0.0
  %565 = vmatpush1.msra.mxu0 %v169
  %566 = vmatprep.subr.mxu0 0.0
  %567 = vmatpush1.msra.mxu0 %v170
  %568 = vmatprep.subr.mxu0 0.0
  %569 = vmatpush1.msra.mxu0 %v171
  %570 = vmatprep.subr.mxu0 0.0
  %571 = vmatpush1.msra.mxu0 %v172
  %572 = vmatprep.subr.mxu0 0.0
  %573 = vmatpush1.msra.mxu0 %v173
  %574 = vmatprep.subr.mxu0 0.0
  %575 = vmatpush1.msra.mxu0 %v174
  %576 = vmatprep.subr.mxu0 0.0
  %577 = vmatpush1.msra.mxu0 %v175
  %578 = vmatprep.subr.mxu0 0.0
  %579 = vmatpush1.msra.mxu0 %v176
  %580 = vmatprep.subr.mxu0 0.0
  %581 = vmatpush1.msra.mxu0 %v177
  %582 = vmatprep.subr.mxu0 0.0
  %583 = vmatpush1.msra.mxu0 %v178
  %584 = vmatprep.subr.mxu0 0.0
  %585 = vmatpush1.msra.mxu0 %v179
  %586 = vmatprep.subr.mxu0 0.0
  %587 = vmatpush1.msra.mxu0 %v180
  %588 = vmatprep.subr.mxu0 0.0
  %589 = vmatpush1.msra.mxu0 %v181
  %590 = vmatprep.subr.mxu0 0.0
  %591 = vmatpush1.msra.mxu0 0.0
  %592 = vmatprep.subr.mxu0 0.0
  %593 = vmatpush1.msra.mxu0 0.0
  %594 = vmatprep.subr.mxu0 0.0
  %595 = vmatpush1.msra.mxu0 0.0
  %596 = vmatprep.subr.mxu0 0.0
  %597 = vmatpush1.msra.mxu0 0.0
  %598 = vmatprep.subr.mxu0 0.0
  %599 = vmatpush1.msra.mxu0 0.0
  %600 = vmatprep.subr.mxu0 0.0
  %601 = vmatpush1.msra.mxu0 0.0
  %602 = vmatprep.subr.mxu0 0.0
  %603 = vmatpush1.msra.mxu0 0.0
  %604 = vmatprep.subr.mxu0 0.0
  %605 = vmatpush1.msra.mxu0 0.0
  %606 = vmatprep.subr.mxu0 0.0
  %607 = vmatpush1.msra.mxu0 0.0
  %608 = vmatprep.subr.mxu0 0.0
  %609 = vmatpush1.msra.mxu0 0.0
  %610 = vmatprep.subr.mxu0 0.0
  %611 = vmatpush1.msra.mxu0 0.0
  %612 = vmatprep.subr.mxu0 0.0
  %613 = vmatpush1.msra.mxu0 0.0
  %614 = vmatprep.subr.mxu0 0.0
  %615 = vmatpush1.msra.mxu0 0.0
  %616 = vmatprep.subr.mxu0 0.0
  %617 = vmatpush1.msra.mxu0 0.0
  %618 = vmatprep.subr.mxu0 0.0
  %619 = vmatpush1.msra.mxu0 0.0
  %620 = vmatprep.subr.mxu0 0.0
  %621 = vmatpush1.msra.mxu0 0.0
  %622 = vmatprep.mubr.f32.mxu0 0.0
  %623 = vmatmul.mubr.f32.gmra.mrb[0].mxu0 %v553
  %v624 = vpop.f32.mrb[0].mxu0
  %v625 = vadd.f32 %v557, %v624
  %v626 = vpop.f32.mrb[0].mxu0
  %627 = vdwg.mxu0
  %v628 = vtanh.pop %v625
  %s629 = scalar_lea.vmem %s4, 40
  %630 = vst [vmem:[%s629] sm:$0xff] %v628
  %s631 = scalar_lea.vmem [#allocation3], 48
  %v632 = vld [vmem:[%s631] sm:$0xff]
  %633 = vmatprep.subr.mxu0 0.0
  %634 = vmatpush1.msra.mxu0 %v166
  %635 = vmatprep.subr.mxu0 0.0
  %636 = vmatpush1.msra.mxu0 %v167
  %637 = vmatprep.subr.mxu0 0.0
  %638 = vmatpush1.msra.mxu0 %v168
  %639 = vmatprep.subr.mxu0 0.0
  %640 = vmatpush1.msra.mxu0 %v169
  %641 = vmatprep.subr.mxu0 0.0
  %642 = vmatpush1.msra.mxu0 %v170
  %643 = vmatprep.subr.mxu0 0.0
  %644 = vmatpush1.msra.mxu0 %v171
  %645 = vmatprep.subr.mxu0 0.0
  %646 = vmatpush1.msra.mxu0 %v172
  %647 = vmatprep.subr.mxu0 0.0
  %648 = vmatpush1.msra.mxu0 %v173
  %649 = vmatprep.subr.mxu0 0.0
  %650 = vmatpush1.msra.mxu0 %v174
  %651 = vmatprep.subr.mxu0 0.0
  %652 = vmatpush1.msra.mxu0 %v175
  %653 = vmatprep.subr.mxu0 0.0
  %654 = vmatpush1.msra.mxu0 %v176
  %655 = vmatprep.subr.mxu0 0.0
  %656 = vmatpush1.msra.mxu0 %v177
  %657 = vmatprep.subr.mxu0 0.0
  %658 = vmatpush1.msra.mxu0 %v178
  %659 = vmatprep.subr.mxu0 0.0
  %660 = vmatpush1.msra.mxu0 %v179
  %661 = vmatprep.subr.mxu0 0.0
  %662 = vmatpush1.msra.mxu0 %v180
  %663 = vmatprep.subr.mxu0 0.0
  %664 = vmatpush1.msra.mxu0 %v181
  %665 = vmatprep.subr.mxu0 0.0
  %666 = vmatpush1.msra.mxu0 0.0
  %667 = vmatprep.subr.mxu0 0.0
  %668 = vmatpush1.msra.mxu0 0.0
  %669 = vmatprep.subr.mxu0 0.0
  %670 = vmatpush1.msra.mxu0 0.0
  %671 = vmatprep.subr.mxu0 0.0
  %672 = vmatpush1.msra.mxu0 0.0
  %673 = vmatprep.subr.mxu0 0.0
  %674 = vmatpush1.msra.mxu0 0.0
  %675 = vmatprep.subr.mxu0 0.0
  %676 = vmatpush1.msra.mxu0 0.0
  %677 = vmatprep.subr.mxu0 0.0
  %678 = vmatpush1.msra.mxu0 0.0
  %679 = vmatprep.subr.mxu0 0.0
  %680 = vmatpush1.msra.mxu0 0.0
  %681 = vmatprep.subr.mxu0 0.0
  %682 = vmatpush1.msra.mxu0 0.0
  %683 = vmatprep.subr.mxu0 0.0
  %684 = vmatpush1.msra.mxu0 0.0
  %685 = vmatprep.subr.mxu0 0.0
  %686 = vmatpush1.msra.mxu0 0.0
  %687 = vmatprep.subr.mxu0 0.0
  %688 = vmatpush1.msra.mxu0 0.0
  %689 = vmatprep.subr.mxu0 0.0
  %690 = vmatpush1.msra.mxu0 0.0
  %691 = vmatprep.subr.mxu0 0.0
  %692 = vmatpush1.msra.mxu0 0.0
  %693 = vmatprep.subr.mxu0 0.0
  %694 = vmatpush1.msra.mxu0 0.0
  %695 = vmatprep.subr.mxu0 0.0
  %696 = vmatpush1.msra.mxu0 0.0
  %697 = vmatprep.mubr.f32.mxu0 0.0
  %698 = vmatmul.mubr.f32.gmra.mrb[0].mxu0 %v628
  %v699 = vpop.f32.mrb[0].mxu0
  %v700 = vadd.f32 %v632, %v699
  %v701 = vpop.f32.mrb[0].mxu0
  %702 = vdwg.mxu0
  %v703 = vtanh.pop %v700
  %s704 = scalar_lea.vmem %s4, 48
  %705 = vst [vmem:[%s704] sm:$0xff] %v703
  %s706 = scalar_lea.vmem [#allocation3], 56
  %v707 = vld [vmem:[%s706] sm:$0xff]
  %708 = vmatprep.subr.mxu0 0.0
  %709 = vmatpush1.msra.mxu0 %v166
  %710 = vmatprep.subr.mxu0 0.0
  %711 = vmatpush1.msra.mxu0 %v167
  %712 = vmatprep.subr.mxu0 0.0
  %713 = vmatpush1.msra.mxu0 %v168
  %714 = vmatprep.subr.mxu0 0.0
  %715 = vmatpush1.msra.mxu0 %v169
  %716 = vmatprep.subr.mxu0 0.0
  %717 = vmatpush1.msra.mxu0 %v170
  %718 = vmatprep.subr.mxu0 0.0
  %719 = vmatpush1.msra.mxu0 %v171
  %720 = vmatprep.subr.mxu0 0.0
  %721 = vmatpush1.msra.mxu0 %v172
  %722 = vmatprep.subr.mxu0 0.0
  %723 = vmatpush1.msra.mxu0 %v173
  %724 = vmatprep.subr.mxu0 0.0
  %725 = vmatpush1.msra.mxu0 %v174
  %726 = vmatprep.subr.mxu0 0.0
  %727 = vmatpush1.msra.mxu0 %v175
  %728 = vmatprep.subr.mxu0 0.0
  %729 = vmatpush1.msra.mxu0 %v176
  %730 = vmatprep.subr.mxu0 0.0
  %731 = vmatpush1.msra.mxu0 %v177
  %732 = vmatprep.subr.mxu0 0.0
  %733 = vmatpush1.msra.mxu0 %v178
  %734 = vmatprep.subr.mxu0 0.0
  %735 = vmatpush1.msra.mxu0 %v179
  %736 = vmatprep.subr.mxu0 0.0
  %737 = vmatpush1.msra.mxu0 %v180
  %738 = vmatprep.subr.mxu0 0.0
  %739 = vmatpush1.msra.mxu0 %v181
  %740 = vmatprep.subr.mxu0 0.0
  %741 = vmatpush1.msra.mxu0 0.0
  %742 = vmatprep.subr.mxu0 0.0
  %743 = vmatpush1.msra.mxu0 0.0
  %744 = vmatprep.subr.mxu0 0.0
  %745 = vmatpush1.msra.mxu0 0.0
  %746 = vmatprep.subr.mxu0 0.0
  %747 = vmatpush1.msra.mxu0 0.0
  %748 = vmatprep.subr.mxu0 0.0
  %749 = vmatpush1.msra.mxu0 0.0
  %750 = vmatprep.subr.mxu0 0.0
  %751 = vmatpush1.msra.mxu0 0.0
  %752 = vmatprep.subr.mxu0 0.0
  %753 = vmatpush1.msra.mxu0 0.0
  %754 = vmatprep.subr.mxu0 0.0
  %755 = vmatpush1.msra.mxu0 0.0
  %756 = vmatprep.subr.mxu0 0.0
  %757 = vmatpush1.msra.mxu0 0.0
  %758 = vmatprep.subr.mxu0 0.0
  %759 = vmatpush1.msra.mxu0 0.0
  %760 = vmatprep.subr.mxu0 0.0
  %761 = vmatpush1.msra.mxu0 0.0
  %762 = vmatprep.subr.mxu0 0.0
  %763 = vmatpush1.msra.mxu0 0.0
  %764 = vmatprep.subr.mxu0 0.0
  %765 = vmatpush1.msra.mxu0 0.0
  %766 = vmatprep.subr.mxu0 0.0
  %767 = vmatpush1.msra.mxu0 0.0
  %768 = vmatprep.subr.mxu0 0.0
  %769 = vmatpush1.msra.mxu0 0.0
  %770 = vmatprep.subr.mxu0 0.0
  %771 = vmatpush1.msra.mxu0 0.0
  %772 = vmatprep.mubr.f32.mxu0 0.0
  %773 = vmatmul.mubr.f32.gmra.mrb[0].mxu0 %v703
  %v774 = vpop.f32.mrb[0].mxu0
  %v775 = vadd.f32 %v707, %v774
  %v776 = vpop.f32.mrb[0].mxu0
  %777 = vdwg.mxu0
  %v778 = vtanh.pop %v775
  %s779 = scalar_lea.vmem %s4, 56
  %780 = vst [vmem:[%s779] sm:$0xff] %v778
  %781 = vst [vmem:[#allocation2] sm:$0xff] %v778
  // Predicated region
  $region22: #{rnn_cell_forward.1} parent=0 // pred_check
    _
  $region23: #{rnn_cell_forward.1} parent=0 // pred_check_branch
    %783 = sbr.rel (0) target = $region25
  $region24: #{rnn_cell_forward.1} parent=0 // pred_region
    _
  $region25: #{rnn_cell_forward.1} parent=0 // pred_fallthru
    _
  // Predicated region
  $region26: #{rnn_cell_forward.1} parent=0 // pred_check
    _
  $region27: #{rnn_cell_forward.1} parent=0 // pred_check_branch
    %785 = sbr.rel (0) target = $region29
  $region28: #{rnn_cell_forward.1} parent=0 // pred_region
    _
  $region29: #{rnn_cell_forward.1} parent=0 // pred_fallthru
    _

</llo_original>
